<compile_context>
chip_gen: v7x
topology: tpu7x:2x2x1
jax: 0.10.0
libtpu: 0.0.40
codegen_flags: <defaults>
</compile_context>

<pallas_src>
import functools

import jax
import jax.numpy as jnp
from jax.experimental import pallas as pl
from jax.experimental.pallas import tpu as pltpu


def lstm_classifier_kernel(x_ref, w_ih_ref, w_hh_ref, b_ref, w_p_ref, b_p_ref,
                           out_ref, *, batch):
    """Fused-gate LSTM recurrence + final Linear.

    x_ref   : (seq*batch, embed)      bf16  (time-major rows: t0b0, t0b1, t1b0, ...)
    w_ih_ref: (embed, 4*hidden)       bf16  fused gates [i|f|g|o]
    w_hh_ref: (hidden, 4*hidden)      bf16
    b_ref   : (1, 4*hidden)           f32   (b_ih + b_hh, folded)
    w_p_ref : (hidden, out_pad)       bf16  (zero-padded to 128 lanes)
    b_p_ref : (1, out_pad)            f32
    out_ref : (batch, out_pad)        f32
    """
    seq = x_ref.shape[0] // batch
    hidden = w_hh_ref.shape[0]

    # Loop-invariant loads: issued once, not per timestep.
    w_hh = w_hh_ref[...]                      # (hidden, 4H) bf16

    # Input projection for ALL timesteps in one matmul; bias folded here so the
    # recurrent path has no bias broadcast at all.
    x_proj = (jnp.dot(x_ref[...], w_ih_ref[...],
                      preferred_element_type=jnp.float32)
              + b_ref[...])                   # (seq*batch, 4H) f32

    h = jnp.zeros((batch, hidden), jnp.float32)
    c = jnp.zeros((batch, hidden), jnp.float32)

    # Full static unroll: seq is a compile-time Python int -> static slices,
    # cross-iteration scheduling visibility.
    for t in range(seq):
        gates = (x_proj[t * batch:(t + 1) * batch, :]
                 + jnp.dot(h.astype(w_hh.dtype), w_hh,
                           preferred_element_type=jnp.float32))  # (batch, 4H) f32
        i = jax.nn.sigmoid(gates[:, 0 * hidden:1 * hidden])
        f = jax.nn.sigmoid(gates[:, 1 * hidden:2 * hidden])
        g = jnp.tanh(gates[:, 2 * hidden:3 * hidden])
        o = jax.nn.sigmoid(gates[:, 3 * hidden:4 * hidden])
        c = f * c + i * g
        h = o * jnp.tanh(c)

    # Final Linear on h_T, lane-dense (padded) store.
    out_ref[...] = (jnp.dot(h.astype(w_p_ref.dtype), w_p_ref[...],
                            preferred_element_type=jnp.float32)
                    + b_p_ref[...])


def classifier_forward(token_ids, params):
    """token_ids: (seq, batch) int32 -> logits (batch, output_size) f32."""
    emb_table, w_ih, w_hh, b, w_p, b_p = params
    seq, batch = token_ids.shape
    hidden = w_hh.shape[0]
    output_size = w_p.shape[1]

    # Embedding gather (plain-JAX glue), flattened time-major to (seq*batch, E).
    x2d = jnp.take(emb_table, token_ids.reshape(-1), axis=0)
    x2d = x2d.astype(jnp.bfloat16)

    # Pad the output projection to a 128-lane multiple for an unmasked store.
    out_pad = ((output_size + 127) // 128) * 128
    w_p_pad = jnp.zeros((hidden, out_pad), jnp.bfloat16)
    w_p_pad = w_p_pad.at[:, :output_size].set(w_p.astype(jnp.bfloat16))
    b_p_pad = jnp.zeros((1, out_pad), jnp.float32)
    b_p_pad = b_p_pad.at[:, :output_size].set(b_p)

    kernel = functools.partial(lstm_classifier_kernel, batch=batch)
    vmem = pl.BlockSpec(memory_space=pltpu.MemorySpace.VMEM)
    logits_pad = pl.pallas_call(
        kernel,
        out_shape=jax.ShapeDtypeStruct((batch, out_pad), jnp.float32),
        in_specs=[vmem] * 6,
        out_specs=vmem,
    )(x2d,
      w_ih.astype(jnp.bfloat16),
      w_hh.astype(jnp.bfloat16),
      b,
      w_p_pad,
      b_p_pad)
    return logits_pad[:, :output_size]


def reference_forward(token_ids, params):
    """Pure-JAX f32 reference matching PyTorch Embedding + LSTM + Linear."""
    emb_table, w_ih, w_hh, b, w_p, b_p = params
    embedded = jnp.take(emb_table, token_ids, axis=0)   # (seq, batch, embed)
    seq, batch, _ = embedded.shape
    hidden = w_hh.shape[0]
    h = jnp.zeros((batch, hidden), jnp.float32)
    c = jnp.zeros((batch, hidden), jnp.float32)
    for t in range(seq):
        gates = embedded[t] @ w_ih + h @ w_hh + b       # (batch, 4H)
        i = jax.nn.sigmoid(gates[:, 0 * hidden:1 * hidden])
        f = jax.nn.sigmoid(gates[:, 1 * hidden:2 * hidden])
        g = jnp.tanh(gates[:, 2 * hidden:3 * hidden])
        o = jax.nn.sigmoid(gates[:, 3 * hidden:4 * hidden])
        c = f * c + i * g
        h = o * jnp.tanh(c)
    return h @ w_p + b_p


def init_params(key, vocab_size, embedding_length, hidden_size, output_size):
    """Deterministic synthetic parameters, pre-packed in fused-gate layout."""
    ks = jax.random.split(key, 7)
    scale = 0.1
    emb_table = scale * jax.random.normal(
        ks[0], (vocab_size, embedding_length), jnp.float32)
    # PyTorch weight_ih_l0 is (4*hidden, embed); we store it transposed and
    # gate-fused as (embed, 4*hidden), gate order (i, f, g, o).
    w_ih = scale * jax.random.normal(
        ks[1], (embedding_length, 4 * hidden_size), jnp.float32)
    w_hh = scale * jax.random.normal(
        ks[2], (hidden_size, 4 * hidden_size), jnp.float32)
    b_ih = scale * jax.random.normal(ks[3], (1, 4 * hidden_size), jnp.float32)
    b_hh = scale * jax.random.normal(ks[4], (1, 4 * hidden_size), jnp.float32)
    b = b_ih + b_hh  # PyTorch adds both biases; fold them once.
    w_p = scale * jax.random.normal(
        ks[5], (hidden_size, output_size), jnp.float32)
    b_p = scale * jax.random.normal(ks[6], (1, output_size), jnp.float32)
    return (emb_table, w_ih, w_hh, b, w_p, b_p)


if __name__ == "__main__":
    seq_len = 8
    batch = 2
    vocab_size = 50
    embedding_length = 32
    hidden_size = 32
    output_size = 8

    key = jax.random.PRNGKey(0)
    k_tok, k_par = jax.random.split(key)
    params = init_params(k_par, vocab_size, embedding_length,
                         hidden_size, output_size)
    token_ids = jax.random.randint(k_tok, (seq_len, batch), 0, vocab_size,
                                   dtype=jnp.int32)

    logits = classifier_forward(token_ids, params)
    logits = jax.block_until_ready(logits)

    ref = reference_forward(token_ids, params)
    assert logits.shape == (batch, output_size)
    # Kernel uses bf16 MXU operands with f32 accumulation; reference is pure
    # f32, so allow a small tolerance for the bf16 quantization of operands.
    assert jnp.allclose(logits, ref, atol=2e-2, rtol=2e-2), "mismatch vs reference"

    print("KERNEL_OK")
</pallas_src>

<mosaic_0001>
module attributes {stable_mosaic.version = 11 : i64} {
  func.func @lstm_classifier_kernel(%arg0: memref<16x32xbf16, #tpu.memory_space<vmem>>, %arg1: memref<32x128xbf16, #tpu.memory_space<vmem>>, %arg2: memref<32x128xbf16, #tpu.memory_space<vmem>>, %arg3: memref<1x128xf32, #tpu.memory_space<vmem>>, %arg4: memref<32x128xbf16, #tpu.memory_space<vmem>>, %arg5: memref<1x128xf32, #tpu.memory_space<vmem>>, %arg6: memref<2x128xf32, #tpu.memory_space<vmem>>) attributes {dimension_semantics = [], scalar_prefetch = 0 : i64, scratch_operands = 0 : i64, tpu.core_type = #tpu.core_type<tc>} {
    %c0 = arith.constant 0 : index
    %c0_0 = arith.constant 0 : index
    %0 = vector.load %arg2[%c0, %c0_0] : memref<32x128xbf16, #tpu.memory_space<vmem>>, vector<32x128xbf16>
    %c0_1 = arith.constant 0 : index
    %c0_2 = arith.constant 0 : index
    %1 = vector.load %arg0[%c0_1, %c0_2] : memref<16x32xbf16, #tpu.memory_space<vmem>>, vector<16x32xbf16>
    %c0_3 = arith.constant 0 : index
    %c0_4 = arith.constant 0 : index
    %2 = vector.load %arg1[%c0_3, %c0_4] : memref<32x128xbf16, #tpu.memory_space<vmem>>, vector<32x128xbf16>
    %cst = arith.constant dense<0.000000e+00> : vector<16x128xf32>
    %3 = tpu.matmul %1, %2, %cst {dimension_numbers = #tpu.dot_dimension_numbers<[1], [0], [0], [1], [0, 0, 1, 1], [], []>} : vector<16x32xbf16>, vector<32x128xbf16>, vector<16x128xf32> -> vector<16x128xf32>
    %c0_5 = arith.constant 0 : index
    %c0_6 = arith.constant 0 : index
    %4 = vector.load %arg3[%c0_5, %c0_6] : memref<1x128xf32, #tpu.memory_space<vmem>>, vector<1x128xf32>
    %5 = vector.broadcast %4 : vector<1x128xf32> to vector<16x128xf32>
    %6 = arith.addf %3, %5 : vector<16x128xf32>
    %cst_7 = arith.constant 0.000000e+00 : f32
    %7 = vector.broadcast %cst_7 : f32 to vector<2x32xf32>
    %cst_8 = arith.constant 0.000000e+00 : f32
    %8 = vector.broadcast %cst_8 : f32 to vector<2x32xf32>
    %9 = vector.extract_strided_slice %6 {offsets = [0, 0], sizes = [2, 128], strides = [1, 1]} : vector<16x128xf32> to vector<2x128xf32>
    %10 = arith.truncf %7 : vector<2x32xf32> to vector<2x32xbf16>
    %cst_9 = arith.constant dense<0.000000e+00> : vector<2x128xf32>
    %11 = tpu.matmul %10, %0, %cst_9 {dimension_numbers = #tpu.dot_dimension_numbers<[1], [0], [0], [1], [0, 0, 1, 1], [], []>} : vector<2x32xbf16>, vector<32x128xbf16>, vector<2x128xf32> -> vector<2x128xf32>
    %12 = arith.addf %9, %11 : vector<2x128xf32>
    %13 = vector.extract_strided_slice %12 {offsets = [0, 0], sizes = [2, 32], strides = [1, 1]} : vector<2x128xf32> to vector<2x32xf32>
    %14 = arith.negf %13 : vector<2x32xf32>
    %15 = math.exp %14 : vector<2x32xf32>
    %cst_10 = arith.constant 1.000000e+00 : f32
    %16 = vector.broadcast %cst_10 : f32 to vector<2x32xf32>
    %17 = arith.addf %16, %15 : vector<2x32xf32>
    %18 = arith.divf %16, %17 : vector<2x32xf32>
    %19 = vector.extract_strided_slice %12 {offsets = [0, 32], sizes = [2, 32], strides = [1, 1]} : vector<2x128xf32> to vector<2x32xf32>
    %20 = arith.negf %19 : vector<2x32xf32>
    %21 = math.exp %20 : vector<2x32xf32>
    %cst_11 = arith.constant 1.000000e+00 : f32
    %22 = vector.broadcast %cst_11 : f32 to vector<2x32xf32>
    %23 = arith.addf %22, %21 : vector<2x32xf32>
    %24 = arith.divf %22, %23 : vector<2x32xf32>
    %25 = vector.extract_strided_slice %12 {offsets = [0, 64], sizes = [2, 32], strides = [1, 1]} : vector<2x128xf32> to vector<2x32xf32>
    %26 = math.tanh %25 : vector<2x32xf32>
    %27 = vector.extract_strided_slice %12 {offsets = [0, 96], sizes = [2, 32], strides = [1, 1]} : vector<2x128xf32> to vector<2x32xf32>
    %28 = arith.negf %27 : vector<2x32xf32>
    %29 = math.exp %28 : vector<2x32xf32>
    %cst_12 = arith.constant 1.000000e+00 : f32
    %30 = vector.broadcast %cst_12 : f32 to vector<2x32xf32>
    %31 = arith.addf %30, %29 : vector<2x32xf32>
    %32 = arith.divf %30, %31 : vector<2x32xf32>
    %33 = arith.mulf %24, %8 : vector<2x32xf32>
    %34 = arith.mulf %18, %26 : vector<2x32xf32>
    %35 = arith.addf %33, %34 : vector<2x32xf32>
    %36 = math.tanh %35 : vector<2x32xf32>
    %37 = arith.mulf %32, %36 : vector<2x32xf32>
    %38 = vector.extract_strided_slice %6 {offsets = [2, 0], sizes = [2, 128], strides = [1, 1]} : vector<16x128xf32> to vector<2x128xf32>
    %39 = arith.truncf %37 : vector<2x32xf32> to vector<2x32xbf16>
    %cst_13 = arith.constant dense<0.000000e+00> : vector<2x128xf32>
    %40 = tpu.matmul %39, %0, %cst_13 {dimension_numbers = #tpu.dot_dimension_numbers<[1], [0], [0], [1], [0, 0, 1, 1], [], []>} : vector<2x32xbf16>, vector<32x128xbf16>, vector<2x128xf32> -> vector<2x128xf32>
    %41 = arith.addf %38, %40 : vector<2x128xf32>
    %42 = vector.extract_strided_slice %41 {offsets = [0, 0], sizes = [2, 32], strides = [1, 1]} : vector<2x128xf32> to vector<2x32xf32>
    %43 = arith.negf %42 : vector<2x32xf32>
    %44 = math.exp %43 : vector<2x32xf32>
    %cst_14 = arith.constant 1.000000e+00 : f32
    %45 = vector.broadcast %cst_14 : f32 to vector<2x32xf32>
    %46 = arith.addf %45, %44 : vector<2x32xf32>
    %47 = arith.divf %45, %46 : vector<2x32xf32>
    %48 = vector.extract_strided_slice %41 {offsets = [0, 32], sizes = [2, 32], strides = [1, 1]} : vector<2x128xf32> to vector<2x32xf32>
    %49 = arith.negf %48 : vector<2x32xf32>
    %50 = math.exp %49 : vector<2x32xf32>
    %cst_15 = arith.constant 1.000000e+00 : f32
    %51 = vector.broadcast %cst_15 : f32 to vector<2x32xf32>
    %52 = arith.addf %51, %50 : vector<2x32xf32>
    %53 = arith.divf %51, %52 : vector<2x32xf32>
    %54 = vector.extract_strided_slice %41 {offsets = [0, 64], sizes = [2, 32], strides = [1, 1]} : vector<2x128xf32> to vector<2x32xf32>
    %55 = math.tanh %54 : vector<2x32xf32>
    %56 = vector.extract_strided_slice %41 {offsets = [0, 96], sizes = [2, 32], strides = [1, 1]} : vector<2x128xf32> to vector<2x32xf32>
    %57 = arith.negf %56 : vector<2x32xf32>
    %58 = math.exp %57 : vector<2x32xf32>
    %cst_16 = arith.constant 1.000000e+00 : f32
    %59 = vector.broadcast %cst_16 : f32 to vector<2x32xf32>
    %60 = arith.addf %59, %58 : vector<2x32xf32>
    %61 = arith.divf %59, %60 : vector<2x32xf32>
    %62 = arith.mulf %53, %35 : vector<2x32xf32>
    %63 = arith.mulf %47, %55 : vector<2x32xf32>
    %64 = arith.addf %62, %63 : vector<2x32xf32>
    %65 = math.tanh %64 : vector<2x32xf32>
    %66 = arith.mulf %61, %65 : vector<2x32xf32>
    %67 = vector.extract_strided_slice %6 {offsets = [4, 0], sizes = [2, 128], strides = [1, 1]} : vector<16x128xf32> to vector<2x128xf32>
    %68 = arith.truncf %66 : vector<2x32xf32> to vector<2x32xbf16>
    %cst_17 = arith.constant dense<0.000000e+00> : vector<2x128xf32>
    %69 = tpu.matmul %68, %0, %cst_17 {dimension_numbers = #tpu.dot_dimension_numbers<[1], [0], [0], [1], [0, 0, 1, 1], [], []>} : vector<2x32xbf16>, vector<32x128xbf16>, vector<2x128xf32> -> vector<2x128xf32>
    %70 = arith.addf %67, %69 : vector<2x128xf32>
    %71 = vector.extract_strided_slice %70 {offsets = [0, 0], sizes = [2, 32], strides = [1, 1]} : vector<2x128xf32> to vector<2x32xf32>
    %72 = arith.negf %71 : vector<2x32xf32>
    %73 = math.exp %72 : vector<2x32xf32>
    %cst_18 = arith.constant 1.000000e+00 : f32
    %74 = vector.broadcast %cst_18 : f32 to vector<2x32xf32>
    %75 = arith.addf %74, %73 : vector<2x32xf32>
    %76 = arith.divf %74, %75 : vector<2x32xf32>
    %77 = vector.extract_strided_slice %70 {offsets = [0, 32], sizes = [2, 32], strides = [1, 1]} : vector<2x128xf32> to vector<2x32xf32>
    %78 = arith.negf %77 : vector<2x32xf32>
    %79 = math.exp %78 : vector<2x32xf32>
    %cst_19 = arith.constant 1.000000e+00 : f32
    %80 = vector.broadcast %cst_19 : f32 to vector<2x32xf32>
    %81 = arith.addf %80, %79 : vector<2x32xf32>
    %82 = arith.divf %80, %81 : vector<2x32xf32>
    %83 = vector.extract_strided_slice %70 {offsets = [0, 64], sizes = [2, 32], strides = [1, 1]} : vector<2x128xf32> to vector<2x32xf32>
    %84 = math.tanh %83 : vector<2x32xf32>
    %85 = vector.extract_strided_slice %70 {offsets = [0, 96], sizes = [2, 32], strides = [1, 1]} : vector<2x128xf32> to vector<2x32xf32>
    %86 = arith.negf %85 : vector<2x32xf32>
    %87 = math.exp %86 : vector<2x32xf32>
    %cst_20 = arith.constant 1.000000e+00 : f32
    %88 = vector.broadcast %cst_20 : f32 to vector<2x32xf32>
    %89 = arith.addf %88, %87 : vector<2x32xf32>
    %90 = arith.divf %88, %89 : vector<2x32xf32>
    %91 = arith.mulf %82, %64 : vector<2x32xf32>
    %92 = arith.mulf %76, %84 : vector<2x32xf32>
    %93 = arith.addf %91, %92 : vector<2x32xf32>
    %94 = math.tanh %93 : vector<2x32xf32>
    %95 = arith.mulf %90, %94 : vector<2x32xf32>
    %96 = vector.extract_strided_slice %6 {offsets = [6, 0], sizes = [2, 128], strides = [1, 1]} : vector<16x128xf32> to vector<2x128xf32>
    %97 = arith.truncf %95 : vector<2x32xf32> to vector<2x32xbf16>
    %cst_21 = arith.constant dense<0.000000e+00> : vector<2x128xf32>
    %98 = tpu.matmul %97, %0, %cst_21 {dimension_numbers = #tpu.dot_dimension_numbers<[1], [0], [0], [1], [0, 0, 1, 1], [], []>} : vector<2x32xbf16>, vector<32x128xbf16>, vector<2x128xf32> -> vector<2x128xf32>
    %99 = arith.addf %96, %98 : vector<2x128xf32>
    %100 = vector.extract_strided_slice %99 {offsets = [0, 0], sizes = [2, 32], strides = [1, 1]} : vector<2x128xf32> to vector<2x32xf32>
    %101 = arith.negf %100 : vector<2x32xf32>
    %102 = math.exp %101 : vector<2x32xf32>
    %cst_22 = arith.constant 1.000000e+00 : f32
    %103 = vector.broadcast %cst_22 : f32 to vector<2x32xf32>
    %104 = arith.addf %103, %102 : vector<2x32xf32>
    %105 = arith.divf %103, %104 : vector<2x32xf32>
    %106 = vector.extract_strided_slice %99 {offsets = [0, 32], sizes = [2, 32], strides = [1, 1]} : vector<2x128xf32> to vector<2x32xf32>
    %107 = arith.negf %106 : vector<2x32xf32>
    %108 = math.exp %107 : vector<2x32xf32>
    %cst_23 = arith.constant 1.000000e+00 : f32
    %109 = vector.broadcast %cst_23 : f32 to vector<2x32xf32>
    %110 = arith.addf %109, %108 : vector<2x32xf32>
    %111 = arith.divf %109, %110 : vector<2x32xf32>
    %112 = vector.extract_strided_slice %99 {offsets = [0, 64], sizes = [2, 32], strides = [1, 1]} : vector<2x128xf32> to vector<2x32xf32>
    %113 = math.tanh %112 : vector<2x32xf32>
    %114 = vector.extract_strided_slice %99 {offsets = [0, 96], sizes = [2, 32], strides = [1, 1]} : vector<2x128xf32> to vector<2x32xf32>
    %115 = arith.negf %114 : vector<2x32xf32>
    %116 = math.exp %115 : vector<2x32xf32>
    %cst_24 = arith.constant 1.000000e+00 : f32
    %117 = vector.broadcast %cst_24 : f32 to vector<2x32xf32>
    %118 = arith.addf %117, %116 : vector<2x32xf32>
    %119 = arith.divf %117, %118 : vector<2x32xf32>
    %120 = arith.mulf %111, %93 : vector<2x32xf32>
    %121 = arith.mulf %105, %113 : vector<2x32xf32>
    %122 = arith.addf %120, %121 : vector<2x32xf32>
    %123 = math.tanh %122 : vector<2x32xf32>
    %124 = arith.mulf %119, %123 : vector<2x32xf32>
    %125 = vector.extract_strided_slice %6 {offsets = [8, 0], sizes = [2, 128], strides = [1, 1]} : vector<16x128xf32> to vector<2x128xf32>
    %126 = arith.truncf %124 : vector<2x32xf32> to vector<2x32xbf16>
    %cst_25 = arith.constant dense<0.000000e+00> : vector<2x128xf32>
    %127 = tpu.matmul %126, %0, %cst_25 {dimension_numbers = #tpu.dot_dimension_numbers<[1], [0], [0], [1], [0, 0, 1, 1], [], []>} : vector<2x32xbf16>, vector<32x128xbf16>, vector<2x128xf32> -> vector<2x128xf32>
    %128 = arith.addf %125, %127 : vector<2x128xf32>
    %129 = vector.extract_strided_slice %128 {offsets = [0, 0], sizes = [2, 32], strides = [1, 1]} : vector<2x128xf32> to vector<2x32xf32>
    %130 = arith.negf %129 : vector<2x32xf32>
    %131 = math.exp %130 : vector<2x32xf32>
    %cst_26 = arith.constant 1.000000e+00 : f32
    %132 = vector.broadcast %cst_26 : f32 to vector<2x32xf32>
    %133 = arith.addf %132, %131 : vector<2x32xf32>
    %134 = arith.divf %132, %133 : vector<2x32xf32>
    %135 = vector.extract_strided_slice %128 {offsets = [0, 32], sizes = [2, 32], strides = [1, 1]} : vector<2x128xf32> to vector<2x32xf32>
    %136 = arith.negf %135 : vector<2x32xf32>
    %137 = math.exp %136 : vector<2x32xf32>
    %cst_27 = arith.constant 1.000000e+00 : f32
    %138 = vector.broadcast %cst_27 : f32 to vector<2x32xf32>
    %139 = arith.addf %138, %137 : vector<2x32xf32>
    %140 = arith.divf %138, %139 : vector<2x32xf32>
    %141 = vector.extract_strided_slice %128 {offsets = [0, 64], sizes = [2, 32], strides = [1, 1]} : vector<2x128xf32> to vector<2x32xf32>
    %142 = math.tanh %141 : vector<2x32xf32>
    %143 = vector.extract_strided_slice %128 {offsets = [0, 96], sizes = [2, 32], strides = [1, 1]} : vector<2x128xf32> to vector<2x32xf32>
    %144 = arith.negf %143 : vector<2x32xf32>
    %145 = math.exp %144 : vector<2x32xf32>
    %cst_28 = arith.constant 1.000000e+00 : f32
    %146 = vector.broadcast %cst_28 : f32 to vector<2x32xf32>
    %147 = arith.addf %146, %145 : vector<2x32xf32>
    %148 = arith.divf %146, %147 : vector<2x32xf32>
    %149 = arith.mulf %140, %122 : vector<2x32xf32>
    %150 = arith.mulf %134, %142 : vector<2x32xf32>
    %151 = arith.addf %149, %150 : vector<2x32xf32>
    %152 = math.tanh %151 : vector<2x32xf32>
    %153 = arith.mulf %148, %152 : vector<2x32xf32>
    %154 = vector.extract_strided_slice %6 {offsets = [10, 0], sizes = [2, 128], strides = [1, 1]} : vector<16x128xf32> to vector<2x128xf32>
    %155 = arith.truncf %153 : vector<2x32xf32> to vector<2x32xbf16>
    %cst_29 = arith.constant dense<0.000000e+00> : vector<2x128xf32>
    %156 = tpu.matmul %155, %0, %cst_29 {dimension_numbers = #tpu.dot_dimension_numbers<[1], [0], [0], [1], [0, 0, 1, 1], [], []>} : vector<2x32xbf16>, vector<32x128xbf16>, vector<2x128xf32> -> vector<2x128xf32>
    %157 = arith.addf %154, %156 : vector<2x128xf32>
    %158 = vector.extract_strided_slice %157 {offsets = [0, 0], sizes = [2, 32], strides = [1, 1]} : vector<2x128xf32> to vector<2x32xf32>
    %159 = arith.negf %158 : vector<2x32xf32>
    %160 = math.exp %159 : vector<2x32xf32>
    %cst_30 = arith.constant 1.000000e+00 : f32
    %161 = vector.broadcast %cst_30 : f32 to vector<2x32xf32>
    %162 = arith.addf %161, %160 : vector<2x32xf32>
    %163 = arith.divf %161, %162 : vector<2x32xf32>
    %164 = vector.extract_strided_slice %157 {offsets = [0, 32], sizes = [2, 32], strides = [1, 1]} : vector<2x128xf32> to vector<2x32xf32>
    %165 = arith.negf %164 : vector<2x32xf32>
    %166 = math.exp %165 : vector<2x32xf32>
    %cst_31 = arith.constant 1.000000e+00 : f32
    %167 = vector.broadcast %cst_31 : f32 to vector<2x32xf32>
    %168 = arith.addf %167, %166 : vector<2x32xf32>
    %169 = arith.divf %167, %168 : vector<2x32xf32>
    %170 = vector.extract_strided_slice %157 {offsets = [0, 64], sizes = [2, 32], strides = [1, 1]} : vector<2x128xf32> to vector<2x32xf32>
    %171 = math.tanh %170 : vector<2x32xf32>
    %172 = vector.extract_strided_slice %157 {offsets = [0, 96], sizes = [2, 32], strides = [1, 1]} : vector<2x128xf32> to vector<2x32xf32>
    %173 = arith.negf %172 : vector<2x32xf32>
    %174 = math.exp %173 : vector<2x32xf32>
    %cst_32 = arith.constant 1.000000e+00 : f32
    %175 = vector.broadcast %cst_32 : f32 to vector<2x32xf32>
    %176 = arith.addf %175, %174 : vector<2x32xf32>
    %177 = arith.divf %175, %176 : vector<2x32xf32>
    %178 = arith.mulf %169, %151 : vector<2x32xf32>
    %179 = arith.mulf %163, %171 : vector<2x32xf32>
    %180 = arith.addf %178, %179 : vector<2x32xf32>
    %181 = math.tanh %180 : vector<2x32xf32>
    %182 = arith.mulf %177, %181 : vector<2x32xf32>
    %183 = vector.extract_strided_slice %6 {offsets = [12, 0], sizes = [2, 128], strides = [1, 1]} : vector<16x128xf32> to vector<2x128xf32>
    %184 = arith.truncf %182 : vector<2x32xf32> to vector<2x32xbf16>
    %cst_33 = arith.constant dense<0.000000e+00> : vector<2x128xf32>
    %185 = tpu.matmul %184, %0, %cst_33 {dimension_numbers = #tpu.dot_dimension_numbers<[1], [0], [0], [1], [0, 0, 1, 1], [], []>} : vector<2x32xbf16>, vector<32x128xbf16>, vector<2x128xf32> -> vector<2x128xf32>
    %186 = arith.addf %183, %185 : vector<2x128xf32>
    %187 = vector.extract_strided_slice %186 {offsets = [0, 0], sizes = [2, 32], strides = [1, 1]} : vector<2x128xf32> to vector<2x32xf32>
    %188 = arith.negf %187 : vector<2x32xf32>
    %189 = math.exp %188 : vector<2x32xf32>
    %cst_34 = arith.constant 1.000000e+00 : f32
    %190 = vector.broadcast %cst_34 : f32 to vector<2x32xf32>
    %191 = arith.addf %190, %189 : vector<2x32xf32>
    %192 = arith.divf %190, %191 : vector<2x32xf32>
    %193 = vector.extract_strided_slice %186 {offsets = [0, 32], sizes = [2, 32], strides = [1, 1]} : vector<2x128xf32> to vector<2x32xf32>
    %194 = arith.negf %193 : vector<2x32xf32>
    %195 = math.exp %194 : vector<2x32xf32>
    %cst_35 = arith.constant 1.000000e+00 : f32
    %196 = vector.broadcast %cst_35 : f32 to vector<2x32xf32>
    %197 = arith.addf %196, %195 : vector<2x32xf32>
    %198 = arith.divf %196, %197 : vector<2x32xf32>
    %199 = vector.extract_strided_slice %186 {offsets = [0, 64], sizes = [2, 32], strides = [1, 1]} : vector<2x128xf32> to vector<2x32xf32>
    %200 = math.tanh %199 : vector<2x32xf32>
    %201 = vector.extract_strided_slice %186 {offsets = [0, 96], sizes = [2, 32], strides = [1, 1]} : vector<2x128xf32> to vector<2x32xf32>
    %202 = arith.negf %201 : vector<2x32xf32>
    %203 = math.exp %202 : vector<2x32xf32>
    %cst_36 = arith.constant 1.000000e+00 : f32
    %204 = vector.broadcast %cst_36 : f32 to vector<2x32xf32>
    %205 = arith.addf %204, %203 : vector<2x32xf32>
    %206 = arith.divf %204, %205 : vector<2x32xf32>
    %207 = arith.mulf %198, %180 : vector<2x32xf32>
    %208 = arith.mulf %192, %200 : vector<2x32xf32>
    %209 = arith.addf %207, %208 : vector<2x32xf32>
    %210 = math.tanh %209 : vector<2x32xf32>
    %211 = arith.mulf %206, %210 : vector<2x32xf32>
    %212 = vector.extract_strided_slice %6 {offsets = [14, 0], sizes = [2, 128], strides = [1, 1]} : vector<16x128xf32> to vector<2x128xf32>
    %213 = arith.truncf %211 : vector<2x32xf32> to vector<2x32xbf16>
    %cst_37 = arith.constant dense<0.000000e+00> : vector<2x128xf32>
    %214 = tpu.matmul %213, %0, %cst_37 {dimension_numbers = #tpu.dot_dimension_numbers<[1], [0], [0], [1], [0, 0, 1, 1], [], []>} : vector<2x32xbf16>, vector<32x128xbf16>, vector<2x128xf32> -> vector<2x128xf32>
    %215 = arith.addf %212, %214 : vector<2x128xf32>
    %216 = vector.extract_strided_slice %215 {offsets = [0, 0], sizes = [2, 32], strides = [1, 1]} : vector<2x128xf32> to vector<2x32xf32>
    %217 = arith.negf %216 : vector<2x32xf32>
    %218 = math.exp %217 : vector<2x32xf32>
    %cst_38 = arith.constant 1.000000e+00 : f32
    %219 = vector.broadcast %cst_38 : f32 to vector<2x32xf32>
    %220 = arith.addf %219, %218 : vector<2x32xf32>
    %221 = arith.divf %219, %220 : vector<2x32xf32>
    %222 = vector.extract_strided_slice %215 {offsets = [0, 32], sizes = [2, 32], strides = [1, 1]} : vector<2x128xf32> to vector<2x32xf32>
    %223 = arith.negf %222 : vector<2x32xf32>
    %224 = math.exp %223 : vector<2x32xf32>
    %cst_39 = arith.constant 1.000000e+00 : f32
    %225 = vector.broadcast %cst_39 : f32 to vector<2x32xf32>
    %226 = arith.addf %225, %224 : vector<2x32xf32>
    %227 = arith.divf %225, %226 : vector<2x32xf32>
    %228 = vector.extract_strided_slice %215 {offsets = [0, 64], sizes = [2, 32], strides = [1, 1]} : vector<2x128xf32> to vector<2x32xf32>
    %229 = math.tanh %228 : vector<2x32xf32>
    %230 = vector.extract_strided_slice %215 {offsets = [0, 96], sizes = [2, 32], strides = [1, 1]} : vector<2x128xf32> to vector<2x32xf32>
    %231 = arith.negf %230 : vector<2x32xf32>
    %232 = math.exp %231 : vector<2x32xf32>
    %cst_40 = arith.constant 1.000000e+00 : f32
    %233 = vector.broadcast %cst_40 : f32 to vector<2x32xf32>
    %234 = arith.addf %233, %232 : vector<2x32xf32>
    %235 = arith.divf %233, %234 : vector<2x32xf32>
    %236 = arith.mulf %227, %209 : vector<2x32xf32>
    %237 = arith.mulf %221, %229 : vector<2x32xf32>
    %238 = arith.addf %236, %237 : vector<2x32xf32>
    %239 = math.tanh %238 : vector<2x32xf32>
    %240 = arith.mulf %235, %239 : vector<2x32xf32>
    %241 = arith.truncf %240 : vector<2x32xf32> to vector<2x32xbf16>
    %c0_41 = arith.constant 0 : index
    %c0_42 = arith.constant 0 : index
    %242 = vector.load %arg4[%c0_41, %c0_42] : memref<32x128xbf16, #tpu.memory_space<vmem>>, vector<32x128xbf16>
    %cst_43 = arith.constant dense<0.000000e+00> : vector<2x128xf32>
    %243 = tpu.matmul %241, %242, %cst_43 {dimension_numbers = #tpu.dot_dimension_numbers<[1], [0], [0], [1], [0, 0, 1, 1], [], []>} : vector<2x32xbf16>, vector<32x128xbf16>, vector<2x128xf32> -> vector<2x128xf32>
    %c0_44 = arith.constant 0 : index
    %c0_45 = arith.constant 0 : index
    %244 = vector.load %arg5[%c0_44, %c0_45] : memref<1x128xf32, #tpu.memory_space<vmem>>, vector<1x128xf32>
    %245 = vector.broadcast %244 : vector<1x128xf32> to vector<2x128xf32>
    %246 = arith.addf %243, %245 : vector<2x128xf32>
    %c0_46 = arith.constant 0 : index
    %c0_47 = arith.constant 0 : index
    %247 = vector.load %arg6[%c0_46, %c0_47] : memref<2x128xf32, #tpu.memory_space<vmem>>, vector<2x128xf32>
    tpu.vector_store %arg6[%c0_46, %c0_47], %246 {strides = array<i32>} : memref<2x128xf32, #tpu.memory_space<vmem>>, vector<2x128xf32>,
    return
  }
}

</mosaic_0001>

<llo_original>
// kernel: tpu_custom_call.1
$region0: #{tpu_custom_call.1}
  #allocation0 [shape = 'u32[]', space=smem, size = 0x4, offset = 0x4, fixed_abs, tag = 'smem constant byte address 0x4 - core index']
  #allocation1 [shape = 'u32[144,128]{1,0:T(1,128)}', space=vmem, size = 0x12000, scoped, tag = 'internal scratch']
  %s0 = inlined_call_operand.hbm [shape: bf16[16,32], index: 0, kind: input, shape index: {}]
  %s1 = inlined_call_operand.hbm [shape: bf16[32,128], index: 1, kind: input, shape index: {}]
  %s2 = inlined_call_operand.hbm [shape: bf16[32,128], index: 2, kind: input, shape index: {}]
  %s3 = inlined_call_operand.vmem [shape: f32[1,128], index: 3, kind: input, shape index: {}]
  %s4 = inlined_call_operand.hbm [shape: bf16[32,128], index: 4, kind: input, shape index: {}]
  %s5 = inlined_call_operand.vmem [shape: f32[1,128], index: 5, kind: input, shape index: {}]
  %s6 = inlined_call_operand.hbm [shape: f32[2,128], index: 6, kind: output, shape index: {}]
  %s7 = sld [smem:[#allocation0]]
  $region50: #{tpu_custom_call.1} parent=0
    _
  %s9 = ssub.s32 1, %s7
  %s10 = scalar_select 0, %s9, %s7
  $region1: #{tpu_custom_call.1} parent=0
    #allocation2 [shape = 'u8[4096]{0}', space=vmem, size = 0x1000, scoped, tag = 'input window, operand 0, single buffered']
    #allocation3 [shape = 's32[1]{0}', space=sflag, size = 0x4, scoped, tag = 'scoped memory for tpu_custom_call.1']
    #allocation4 [shape = 's32[1]{0}', space=sflag, size = 0x4, scoped, tag = 'scoped memory for tpu_custom_call.1']
    #allocation5 [shape = 'u8[8192]{0}', space=vmem, size = 0x2000, scoped, tag = 'input window, operand 1, single buffered']
    #allocation6 [shape = 's32[1]{0}', space=sflag, size = 0x4, scoped, tag = 'scoped memory for tpu_custom_call.1']
    #allocation7 [shape = 'u8[8192]{0}', space=vmem, size = 0x2000, scoped, tag = 'input window, operand 2, single buffered']
    #allocation8 [shape = 'u8[8192]{0}', space=vmem, size = 0x2000, scoped, tag = 'input window, operand 4, single buffered']
    #allocation9 [shape = 's32[1]{0}', space=sflag, size = 0x4, scoped, tag = 'scoped memory for tpu_custom_call.1']
    #allocation10 [shape = 'u8[1024]{0}', space=vmem, size = 0x400, scoped, tag = 'output window, operand 0, single buffered']
    %11 = vsyncpa [#allocation3], 0
    %12 = vsyncpa [#allocation6], 0
    %13 = vsyncpa [#allocation9], 0
    %14 = vsyncpa [#allocation4], 0
    // Predicated region
    $region2: #{tpu_custom_call.1} parent=1 // pred_check
      _
    $region3: #{tpu_custom_call.1} parent=1 // pred_check_branch
      %16 = sbr.rel (0) target = $region5
    $region4: #{tpu_custom_call.1} parent=1 // pred_region
      %s18 = ssub.s32 128, 128
      %19 = vsyncadd [#allocation3], %s18
      %s20 = sshll.u32 [#allocation2], 4
      %s21 = int_to_ptr.vmem [resolvable:$true] %s20
      %26 = dma.hbm_to_vmem [thread:$0]  %s0, 128, %s21, [#allocation3], 64, 64, 4
    $region5: #{tpu_custom_call.1} parent=1 // pred_fallthru
      _
    // Predicated region
    $region6: #{tpu_custom_call.1} parent=1 // pred_check
      _
    $region7: #{tpu_custom_call.1} parent=1 // pred_check_branch
      %28 = sbr.rel (0) target = $region9
    $region8: #{tpu_custom_call.1} parent=1 // pred_region
      %s30 = ssub.s32 256, 256
      %31 = vsyncadd [#allocation6], %s30
      %s32 = sshll.u32 [#allocation5], 4
      %s33 = int_to_ptr.vmem [resolvable:$true] %s32
      %38 = dma.hbm_to_vmem [thread:$0]  %s1, 256, %s33, [#allocation6], 64, 64, 4
    $region9: #{tpu_custom_call.1} parent=1 // pred_fallthru
      _
    // Predicated region
    $region10: #{tpu_custom_call.1} parent=1 // pred_check
      _
    $region11: #{tpu_custom_call.1} parent=1 // pred_check_branch
      %40 = sbr.rel (0) target = $region13
    $region12: #{tpu_custom_call.1} parent=1 // pred_region
      %s42 = ssub.s32 256, 256
      %43 = vsyncadd [#allocation6], %s42
      %s44 = sshll.u32 [#allocation7], 4
      %s45 = int_to_ptr.vmem [resolvable:$true] %s44
      %50 = dma.hbm_to_vmem [thread:$0]  %s2, 256, %s45, [#allocation6], 64, 64, 4
    $region13: #{tpu_custom_call.1} parent=1 // pred_fallthru
      _
    // Predicated region
    $region14: #{tpu_custom_call.1} parent=1 // pred_check
      _
    $region15: #{tpu_custom_call.1} parent=1 // pred_check_branch
      %52 = sbr.rel (0) target = $region17
    $region16: #{tpu_custom_call.1} parent=1 // pred_region
      _
    $region17: #{tpu_custom_call.1} parent=1 // pred_fallthru
      _
    // Predicated region
    $region18: #{tpu_custom_call.1} parent=1 // pred_check
      _
    $region19: #{tpu_custom_call.1} parent=1 // pred_check_branch
      %54 = sbr.rel (0) target = $region21
    $region20: #{tpu_custom_call.1} parent=1 // pred_region
      %s56 = ssub.s32 256, 256
      %57 = vsyncadd [#allocation9], %s56
      %s58 = sshll.u32 [#allocation8], 4
      %s59 = int_to_ptr.vmem [resolvable:$true] %s58
      %64 = dma.hbm_to_vmem [thread:$0]  %s4, 256, %s59, [#allocation9], 64, 64, 4
    $region21: #{tpu_custom_call.1} parent=1 // pred_fallthru
      _
    // Predicated region
    $region22: #{tpu_custom_call.1} parent=1 // pred_check
      _
    $region23: #{tpu_custom_call.1} parent=1 // pred_check_branch
      %66 = sbr.rel (0) target = $region25
    $region24: #{tpu_custom_call.1} parent=1 // pred_region
      _
    $region25: #{tpu_custom_call.1} parent=1 // pred_fallthru
      _
    // Predicated region
    $region26: #{tpu_custom_call.1} parent=1 // pred_check
      _
    $region27: #{tpu_custom_call.1} parent=1 // pred_check_branch
      %68 = sbr.rel (0) target = $region29
    $region28: #{tpu_custom_call.1} parent=1 // pred_region
      %69 = dma.done [#allocation3], 128
    $region29: #{tpu_custom_call.1} parent=1 // pred_fallthru
      _
    // Predicated region
    $region30: #{tpu_custom_call.1} parent=1 // pred_check
      _
    $region31: #{tpu_custom_call.1} parent=1 // pred_check_branch
      %71 = sbr.rel (0) target = $region33
    $region32: #{tpu_custom_call.1} parent=1 // pred_region
      %72 = dma.done [#allocation6], 256
    $region33: #{tpu_custom_call.1} parent=1 // pred_fallthru
      _
    // Predicated region
    $region34: #{tpu_custom_call.1} parent=1 // pred_check
      _
    $region35: #{tpu_custom_call.1} parent=1 // pred_check_branch
      %74 = sbr.rel (0) target = $region37
    $region36: #{tpu_custom_call.1} parent=1 // pred_region
      %75 = dma.done [#allocation6], 256
    $region37: #{tpu_custom_call.1} parent=1 // pred_fallthru
      _
    // Predicated region
    $region38: #{tpu_custom_call.1} parent=1 // pred_check
      _
    $region39: #{tpu_custom_call.1} parent=1 // pred_check_branch
      %77 = sbr.rel (0) target = $region41
    $region40: #{tpu_custom_call.1} parent=1 // pred_region
      %78 = dma.done [#allocation9], 256
    $region41: #{tpu_custom_call.1} parent=1 // pred_fallthru
      _
    %v80 = vld [vmem:[#allocation7] sm:$0xf]
    %v81 = vld [vmem:[#allocation7 + $0x4] sm:$0xf]
    %v82 = vld [vmem:[#allocation7 + $0x8] sm:$0xf]
    %v83 = vld [vmem:[#allocation7 + $0xc] sm:$0xf]
    %v84 = vld [vmem:[#allocation2] sm:$0xf]
    %v85 = vld [vmem:[#allocation2 + $0x4] sm:$0xf]
    %v86 = vld [vmem:[#allocation5] sm:$0xf]
    %v87 = vld [vmem:[#allocation5 + $0x4] sm:$0xf]
    %v88 = vld [vmem:[#allocation5 + $0x8] sm:$0xf]
    %v89 = vld [vmem:[#allocation5 + $0xc] sm:$0xf]
    %v90 = vld [vmem:[%s3] sm:$0x1]
    %v92 = vlaneseq
    %v93 = vshrl.u32 %v92, 7
    %v94 = vsub.s32 0, %v93
    %v95 = vrot.slane %v90, %v94
    %v99 = vunpack.c.l.b16 %v84
    %v100 = vunpack.c.l.b16 %v85
    %v101 = vpack.c.b16 %v100, %v99
    %v106 = vunpack.c.l.b16 %v86
    %v107 = vunpack.c.l.b16 %v87
    %v108 = vunpack.c.l.b16 %v88
    %v109 = vunpack.c.l.b16 %v89
    %v110 = vpack.c.b16 %v107, %v106
    %v111 = vpack.c.b16 %v109, %v108
    %vm114 = vcmask 261120
    %v116 = vsel %vm114, %v101, 0
    %118 = vmatprep.subr.bf16.mxu0 0
    %119 = vmatpush1.bf16.msra.mxu0 %v110
    %120 = vmatprep.subr.bf16.mxu0 0
    %121 = vmatpush1.bf16.msra.mxu0 %v111
    %122 = vmatprep.subr.bf16.mxu0 0
    %123 = vmatpush1.bf16.msra.mxu0 0
    %124 = vmatprep.subr.bf16.mxu0 0
    %125 = vmatpush1.bf16.msra.mxu0 0
    %126 = vmatprep.subr.bf16.mxu0 0
    %127 = vmatpush1.bf16.msra.mxu0 0
    %128 = vmatprep.subr.bf16.mxu0 0
    %129 = vmatpush1.bf16.msra.mxu0 0
    %130 = vmatprep.subr.bf16.mxu0 0
    %131 = vmatpush1.bf16.msra.mxu0 0
    %132 = vmatprep.subr.bf16.mxu0 0
    %133 = vmatpush1.bf16.msra.mxu0 0
    %134 = vmatprep.subr.bf16.mxu0 0
    %135 = vmatpush1.bf16.msra.mxu0 0
    %136 = vmatprep.subr.bf16.mxu0 0
    %137 = vmatpush1.bf16.msra.mxu0 0
    %138 = vmatprep.subr.bf16.mxu0 0
    %139 = vmatpush1.bf16.msra.mxu0 0
    %140 = vmatprep.subr.bf16.mxu0 0
    %141 = vmatpush1.bf16.msra.mxu0 0
    %142 = vmatprep.subr.bf16.mxu0 0
    %143 = vmatpush1.bf16.msra.mxu0 0
    %144 = vmatprep.subr.bf16.mxu0 0
    %145 = vmatpush1.bf16.msra.mxu0 0
    %146 = vmatprep.subr.bf16.mxu0 0
    %147 = vmatpush1.bf16.msra.mxu0 0
    %148 = vmatprep.subr.bf16.mxu0 0
    %149 = vmatpush1.bf16.msra.mxu0 0
    %150 = vmatprep.mubr.bf16.mxu0 0
    %151 = vmatmul.mubr.bf16.gmra.mrb[0].mxu0 %v116
    %v152 = vpop.f32.mrb[0].mxu0
    %v153 = vadd.f32 %v95, %v152
    %v154 = vpop.f32.mrb[0].mxu0
    %v155 = vpop.f32.mrb[0].mxu0
    %v156 = vadd.f32 %v95, %v155
    %v157 = vpop.f32.mrb[0].mxu0
    %158 = vdwg.mxu0
    %v163 = vunpack.c.l.b16 %v80
    %v164 = vunpack.c.l.b16 %v81
    %v165 = vunpack.c.l.b16 %v82
    %v166 = vunpack.c.l.b16 %v83
    %v167 = vpack.c.b16 %v164, %v163
    %v168 = vpack.c.b16 %v166, %v165
    %v172 = vsel %vm114, 0, 0
    %174 = vmatprep.subr.bf16.mxu0 0
    %175 = vmatpush1.bf16.msra.mxu0 %v167
    %176 = vmatprep.subr.bf16.mxu0 0
    %177 = vmatpush1.bf16.msra.mxu0 %v168
    %178 = vmatprep.subr.bf16.mxu0 0
    %179 = vmatpush1.bf16.msra.mxu0 0
    %180 = vmatprep.subr.bf16.mxu0 0
    %181 = vmatpush1.bf16.msra.mxu0 0
    %182 = vmatprep.subr.bf16.mxu0 0
    %183 = vmatpush1.bf16.msra.mxu0 0
    %184 = vmatprep.subr.bf16.mxu0 0
    %185 = vmatpush1.bf16.msra.mxu0 0
    %186 = vmatprep.subr.bf16.mxu0 0
    %187 = vmatpush1.bf16.msra.mxu0 0
    %188 = vmatprep.subr.bf16.mxu0 0
    %189 = vmatpush1.bf16.msra.mxu0 0
    %190 = vmatprep.subr.bf16.mxu0 0
    %191 = vmatpush1.bf16.msra.mxu0 0
    %192 = vmatprep.subr.bf16.mxu0 0
    %193 = vmatpush1.bf16.msra.mxu0 0
    %194 = vmatprep.subr.bf16.mxu0 0
    %195 = vmatpush1.bf16.msra.mxu0 0
    %196 = vmatprep.subr.bf16.mxu0 0
    %197 = vmatpush1.bf16.msra.mxu0 0
    %198 = vmatprep.subr.bf16.mxu0 0
    %199 = vmatpush1.bf16.msra.mxu0 0
    %200 = vmatprep.subr.bf16.mxu0 0
    %201 = vmatpush1.bf16.msra.mxu0 0
    %202 = vmatprep.subr.bf16.mxu0 0
    %203 = vmatpush1.bf16.msra.mxu0 0
    %204 = vmatprep.subr.bf16.mxu0 0
    %205 = vmatpush1.bf16.msra.mxu0 0
    %206 = vmatprep.mubr.bf16.mxu0 0
    %207 = vmatmul.mubr.bf16.gmra.mrb[0].mxu0 %v172
    %v208 = vpop.f32.mrb[0].mxu0
    %v209 = vadd.f32 0.0, %v208
    %v210 = vpop.f32.mrb[0].mxu0
    %v211 = vpop.f32.mrb[0].mxu0
    %v212 = vpop.f32.mrb[0].mxu0
    %213 = vdwg.mxu0
    %v214 = vadd.f32 %v153, %v209
    %v215 = vxor.u32 %v214, 2147483648
    %v216 = vmul.f32 %v215, 1.442695
    %v217 = vpow.pop %v216
    %v218 = vadd.f32 %v217, 1.0
    %v219 = vrcp.pop %v218
    %v220 = vmul.f32 1.0, %v219
    %v221 = vtanh.pop %v214
    %v222 = vmul.f32 %v220, 0.0
    %224 = vrot.lane.b32.xlu0 %v221, 64
    %v225 = vpop.permute.xlu0 %224
    %v227 = vmul.f32 %v220, %v225
    %229 = vrot.lane.b32.xlu0 %v227, 32
    %v230 = vpop.permute.xlu0 %229
    %v232 = vadd.f32 %v222, %v230
    %v233 = vtanh.pop %v232
    %235 = vrot.lane.b32.xlu0 %v233, 64
    %v236 = vpop.permute.xlu0 %235
    %v238 = vmul.f32 %v220, %v236
    %v239 = vpack.c.bf16 %v238, %v238
    %241 = vrot.lane.b32.xlu0 %v239, 32
    %v242 = vpop.permute.xlu0 %241
    %v244 = vsel %vm114, %v242, 0
    %246 = vmatprep.subr.bf16.mxu0 0
    %247 = vmatpush1.bf16.msra.mxu0 %v167
    %248 = vmatprep.subr.bf16.mxu0 0
    %249 = vmatpush1.bf16.msra.mxu0 %v168
    %250 = vmatprep.subr.bf16.mxu0 0
    %251 = vmatpush1.bf16.msra.mxu0 0
    %252 = vmatprep.subr.bf16.mxu0 0
    %253 = vmatpush1.bf16.msra.mxu0 0
    %254 = vmatprep.subr.bf16.mxu0 0
    %255 = vmatpush1.bf16.msra.mxu0 0
    %256 = vmatprep.subr.bf16.mxu0 0
    %257 = vmatpush1.bf16.msra.mxu0 0
    %258 = vmatprep.subr.bf16.mxu0 0
    %259 = vmatpush1.bf16.msra.mxu0 0
    %260 = vmatprep.subr.bf16.mxu0 0
    %261 = vmatpush1.bf16.msra.mxu0 0
    %262 = vmatprep.subr.bf16.mxu0 0
    %263 = vmatpush1.bf16.msra.mxu0 0
    %264 = vmatprep.subr.bf16.mxu0 0
    %265 = vmatpush1.bf16.msra.mxu0 0
    %266 = vmatprep.subr.bf16.mxu0 0
    %267 = vmatpush1.bf16.msra.mxu0 0
    %268 = vmatprep.subr.bf16.mxu0 0
    %269 = vmatpush1.bf16.msra.mxu0 0
    %270 = vmatprep.subr.bf16.mxu0 0
    %271 = vmatpush1.bf16.msra.mxu0 0
    %272 = vmatprep.subr.bf16.mxu0 0
    %273 = vmatpush1.bf16.msra.mxu0 0
    %274 = vmatprep.subr.bf16.mxu0 0
    %275 = vmatpush1.bf16.msra.mxu0 0
    %276 = vmatprep.subr.bf16.mxu0 0
    %277 = vmatpush1.bf16.msra.mxu0 0
    %278 = vmatprep.mubr.bf16.mxu0 0
    %279 = vmatmul.mubr.bf16.gmra.mrb[0].mxu0 %v244
    %v280 = vpop.f32.mrb[0].mxu0
    %v281 = vadd.f32 0.0, %v280
    %v282 = vpop.f32.mrb[0].mxu0
    %v283 = vpop.f32.mrb[0].mxu0
    %v284 = vpop.f32.mrb[0].mxu0
    %285 = vdwg.mxu0
    %v287 = vrot.slane %v281, 6
    %v289 = vadd.f32 %v153, %v287
    %v290 = vxor.u32 %v289, 2147483648
    %v291 = vmul.f32 %v290, 1.442695
    %v292 = vpow.pop %v291
    %v293 = vadd.f32 %v292, 1.0
    %v294 = vrcp.pop %v293
    %v295 = vmul.f32 1.0, %v294
    %v296 = vtanh.pop %v289
    %v298 = vrot.slane %v232, 6
    %v300 = vmul.f32 %v295, %v298
    %302 = vrot.lane.b32.xlu0 %v296, 64
    %v303 = vpop.permute.xlu0 %302
    %v305 = vmul.f32 %v295, %v303
    %307 = vrot.lane.b32.xlu0 %v305, 32
    %v308 = vpop.permute.xlu0 %307
    %v310 = vadd.f32 %v300, %v308
    %v311 = vtanh.pop %v310
    %313 = vrot.lane.b32.xlu0 %v311, 64
    %v314 = vpop.permute.xlu0 %313
    %v316 = vmul.f32 %v295, %v314
    %v317 = vpack.c.bf16 %v316, %v316
    %v319 = vrot.slane %v317, 1
    %320 = vrot.lane.b32.xlu0 %v319, 32
    %v321 = vpop.permute.xlu0 %320
    %v323 = vsel %vm114, %v321, 0
    %325 = vmatprep.subr.bf16.mxu0 0
    %326 = vmatpush1.bf16.msra.mxu0 %v167
    %327 = vmatprep.subr.bf16.mxu0 0
    %328 = vmatpush1.bf16.msra.mxu0 %v168
    %329 = vmatprep.subr.bf16.mxu0 0
    %330 = vmatpush1.bf16.msra.mxu0 0
    %331 = vmatprep.subr.bf16.mxu0 0
    %332 = vmatpush1.bf16.msra.mxu0 0
    %333 = vmatprep.subr.bf16.mxu0 0
    %334 = vmatpush1.bf16.msra.mxu0 0
    %335 = vmatprep.subr.bf16.mxu0 0
    %336 = vmatpush1.bf16.msra.mxu0 0
    %337 = vmatprep.subr.bf16.mxu0 0
    %338 = vmatpush1.bf16.msra.mxu0 0
    %339 = vmatprep.subr.bf16.mxu0 0
    %340 = vmatpush1.bf16.msra.mxu0 0
    %341 = vmatprep.subr.bf16.mxu0 0
    %342 = vmatpush1.bf16.msra.mxu0 0
    %343 = vmatprep.subr.bf16.mxu0 0
    %344 = vmatpush1.bf16.msra.mxu0 0
    %345 = vmatprep.subr.bf16.mxu0 0
    %346 = vmatpush1.bf16.msra.mxu0 0
    %347 = vmatprep.subr.bf16.mxu0 0
    %348 = vmatpush1.bf16.msra.mxu0 0
    %349 = vmatprep.subr.bf16.mxu0 0
    %350 = vmatpush1.bf16.msra.mxu0 0
    %351 = vmatprep.subr.bf16.mxu0 0
    %352 = vmatpush1.bf16.msra.mxu0 0
    %353 = vmatprep.subr.bf16.mxu0 0
    %354 = vmatpush1.bf16.msra.mxu0 0
    %355 = vmatprep.subr.bf16.mxu0 0
    %356 = vmatpush1.bf16.msra.mxu0 0
    %357 = vmatprep.mubr.bf16.mxu0 0
    %358 = vmatmul.mubr.bf16.gmra.mrb[0].mxu0 %v323
    %v359 = vpop.f32.mrb[0].mxu0
    %v360 = vadd.f32 0.0, %v359
    %v361 = vpop.f32.mrb[0].mxu0
    %v362 = vpop.f32.mrb[0].mxu0
    %v363 = vpop.f32.mrb[0].mxu0
    %364 = vdwg.mxu0
    %v366 = vrot.slane %v360, 4
    %v368 = vadd.f32 %v153, %v366
    %v369 = vxor.u32 %v368, 2147483648
    %v370 = vmul.f32 %v369, 1.442695
    %v371 = vpow.pop %v370
    %v372 = vadd.f32 %v371, 1.0
    %v373 = vrcp.pop %v372
    %v374 = vmul.f32 1.0, %v373
    %v375 = vtanh.pop %v368
    %v377 = vrot.slane %v310, 6
    %v379 = vmul.f32 %v374, %v377
    %381 = vrot.lane.b32.xlu0 %v375, 64
    %v382 = vpop.permute.xlu0 %381
    %v384 = vmul.f32 %v374, %v382
    %386 = vrot.lane.b32.xlu0 %v384, 32
    %v387 = vpop.permute.xlu0 %386
    %v389 = vadd.f32 %v379, %v387
    %v390 = vtanh.pop %v389
    %392 = vrot.lane.b32.xlu0 %v390, 64
    %v393 = vpop.permute.xlu0 %392
    %v395 = vmul.f32 %v374, %v393
    %v396 = vpack.c.bf16 %v395, %v395
    %v398 = vrot.slane %v396, 2
    %399 = vrot.lane.b32.xlu0 %v398, 32
    %v400 = vpop.permute.xlu0 %399
    %v402 = vsel %vm114, %v400, 0
    %404 = vmatprep.subr.bf16.mxu0 0
    %405 = vmatpush1.bf16.msra.mxu0 %v167
    %406 = vmatprep.subr.bf16.mxu0 0
    %407 = vmatpush1.bf16.msra.mxu0 %v168
    %408 = vmatprep.subr.bf16.mxu0 0
    %409 = vmatpush1.bf16.msra.mxu0 0
    %410 = vmatprep.subr.bf16.mxu0 0
    %411 = vmatpush1.bf16.msra.mxu0 0
    %412 = vmatprep.subr.bf16.mxu0 0
    %413 = vmatpush1.bf16.msra.mxu0 0
    %414 = vmatprep.subr.bf16.mxu0 0
    %415 = vmatpush1.bf16.msra.mxu0 0
    %416 = vmatprep.subr.bf16.mxu0 0
    %417 = vmatpush1.bf16.msra.mxu0 0
    %418 = vmatprep.subr.bf16.mxu0 0
    %419 = vmatpush1.bf16.msra.mxu0 0
    %420 = vmatprep.subr.bf16.mxu0 0
    %421 = vmatpush1.bf16.msra.mxu0 0
    %422 = vmatprep.subr.bf16.mxu0 0
    %423 = vmatpush1.bf16.msra.mxu0 0
    %424 = vmatprep.subr.bf16.mxu0 0
    %425 = vmatpush1.bf16.msra.mxu0 0
    %426 = vmatprep.subr.bf16.mxu0 0
    %427 = vmatpush1.bf16.msra.mxu0 0
    %428 = vmatprep.subr.bf16.mxu0 0
    %429 = vmatpush1.bf16.msra.mxu0 0
    %430 = vmatprep.subr.bf16.mxu0 0
    %431 = vmatpush1.bf16.msra.mxu0 0
    %432 = vmatprep.subr.bf16.mxu0 0
    %433 = vmatpush1.bf16.msra.mxu0 0
    %434 = vmatprep.subr.bf16.mxu0 0
    %435 = vmatpush1.bf16.msra.mxu0 0
    %436 = vmatprep.mubr.bf16.mxu0 0
    %437 = vmatmul.mubr.bf16.gmra.mrb[0].mxu0 %v402
    %v438 = vpop.f32.mrb[0].mxu0
    %v439 = vadd.f32 0.0, %v438
    %v440 = vpop.f32.mrb[0].mxu0
    %v441 = vpop.f32.mrb[0].mxu0
    %v442 = vpop.f32.mrb[0].mxu0
    %443 = vdwg.mxu0
    %v445 = vrot.slane %v439, 2
    %v447 = vadd.f32 %v153, %v445
    %v448 = vxor.u32 %v447, 2147483648
    %v449 = vmul.f32 %v448, 1.442695
    %v450 = vpow.pop %v449
    %v451 = vadd.f32 %v450, 1.0
    %v452 = vrcp.pop %v451
    %v453 = vmul.f32 1.0, %v452
    %v454 = vtanh.pop %v447
    %v456 = vrot.slane %v389, 6
    %v458 = vmul.f32 %v453, %v456
    %460 = vrot.lane.b32.xlu0 %v454, 64
    %v461 = vpop.permute.xlu0 %460
    %v463 = vmul.f32 %v453, %v461
    %465 = vrot.lane.b32.xlu0 %v463, 32
    %v466 = vpop.permute.xlu0 %465
    %v468 = vadd.f32 %v458, %v466
    %v469 = vtanh.pop %v468
    %471 = vrot.lane.b32.xlu0 %v469, 64
    %v472 = vpop.permute.xlu0 %471
    %v474 = vmul.f32 %v453, %v472
    %v475 = vpack.c.bf16 %v474, %v474
    %v477 = vrot.slane %v475, 3
    %478 = vrot.lane.b32.xlu0 %v477, 32
    %v479 = vpop.permute.xlu0 %478
    %v481 = vsel %vm114, %v479, 0
    %483 = vmatprep.subr.bf16.mxu0 0
    %484 = vmatpush1.bf16.msra.mxu0 %v167
    %485 = vmatprep.subr.bf16.mxu0 0
    %486 = vmatpush1.bf16.msra.mxu0 %v168
    %487 = vmatprep.subr.bf16.mxu0 0
    %488 = vmatpush1.bf16.msra.mxu0 0
    %489 = vmatprep.subr.bf16.mxu0 0
    %490 = vmatpush1.bf16.msra.mxu0 0
    %491 = vmatprep.subr.bf16.mxu0 0
    %492 = vmatpush1.bf16.msra.mxu0 0
    %493 = vmatprep.subr.bf16.mxu0 0
    %494 = vmatpush1.bf16.msra.mxu0 0
    %495 = vmatprep.subr.bf16.mxu0 0
    %496 = vmatpush1.bf16.msra.mxu0 0
    %497 = vmatprep.subr.bf16.mxu0 0
    %498 = vmatpush1.bf16.msra.mxu0 0
    %499 = vmatprep.subr.bf16.mxu0 0
    %500 = vmatpush1.bf16.msra.mxu0 0
    %501 = vmatprep.subr.bf16.mxu0 0
    %502 = vmatpush1.bf16.msra.mxu0 0
    %503 = vmatprep.subr.bf16.mxu0 0
    %504 = vmatpush1.bf16.msra.mxu0 0
    %505 = vmatprep.subr.bf16.mxu0 0
    %506 = vmatpush1.bf16.msra.mxu0 0
    %507 = vmatprep.subr.bf16.mxu0 0
    %508 = vmatpush1.bf16.msra.mxu0 0
    %509 = vmatprep.subr.bf16.mxu0 0
    %510 = vmatpush1.bf16.msra.mxu0 0
    %511 = vmatprep.subr.bf16.mxu0 0
    %512 = vmatpush1.bf16.msra.mxu0 0
    %513 = vmatprep.subr.bf16.mxu0 0
    %514 = vmatpush1.bf16.msra.mxu0 0
    %515 = vmatprep.mubr.bf16.mxu0 0
    %516 = vmatmul.mubr.bf16.gmra.mrb[0].mxu0 %v481
    %v517 = vpop.f32.mrb[0].mxu0
    %v518 = vadd.f32 0.0, %v517
    %v519 = vpop.f32.mrb[0].mxu0
    %v520 = vpop.f32.mrb[0].mxu0
    %v521 = vpop.f32.mrb[0].mxu0
    %522 = vdwg.mxu0
    %v523 = vadd.f32 %v156, %v518
    %v524 = vxor.u32 %v523, 2147483648
    %v525 = vmul.f32 %v524, 1.442695
    %v526 = vpow.pop %v525
    %v527 = vadd.f32 %v526, 1.0
    %v528 = vrcp.pop %v527
    %v529 = vmul.f32 1.0, %v528
    %v530 = vtanh.pop %v523
    %v532 = vrot.slane %v468, 6
    %v534 = vmul.f32 %v529, %v532
    %536 = vrot.lane.b32.xlu0 %v530, 64
    %v537 = vpop.permute.xlu0 %536
    %v539 = vmul.f32 %v529, %v537
    %541 = vrot.lane.b32.xlu0 %v539, 32
    %v542 = vpop.permute.xlu0 %541
    %v544 = vadd.f32 %v534, %v542
    %v545 = vtanh.pop %v544
    %547 = vrot.lane.b32.xlu0 %v545, 64
    %v548 = vpop.permute.xlu0 %547
    %v550 = vmul.f32 %v529, %v548
    %v551 = vpack.c.bf16 %v550, %v550
    %553 = vrot.lane.b32.xlu0 %v551, 32
    %v554 = vpop.permute.xlu0 %553
    %v556 = vsel %vm114, %v554, 0
    %558 = vmatprep.subr.bf16.mxu0 0
    %559 = vmatpush1.bf16.msra.mxu0 %v167
    %560 = vmatprep.subr.bf16.mxu0 0
    %561 = vmatpush1.bf16.msra.mxu0 %v168
    %562 = vmatprep.subr.bf16.mxu0 0
    %563 = vmatpush1.bf16.msra.mxu0 0
    %564 = vmatprep.subr.bf16.mxu0 0
    %565 = vmatpush1.bf16.msra.mxu0 0
    %566 = vmatprep.subr.bf16.mxu0 0
    %567 = vmatpush1.bf16.msra.mxu0 0
    %568 = vmatprep.subr.bf16.mxu0 0
    %569 = vmatpush1.bf16.msra.mxu0 0
    %570 = vmatprep.subr.bf16.mxu0 0
    %571 = vmatpush1.bf16.msra.mxu0 0
    %572 = vmatprep.subr.bf16.mxu0 0
    %573 = vmatpush1.bf16.msra.mxu0 0
    %574 = vmatprep.subr.bf16.mxu0 0
    %575 = vmatpush1.bf16.msra.mxu0 0
    %576 = vmatprep.subr.bf16.mxu0 0
    %577 = vmatpush1.bf16.msra.mxu0 0
    %578 = vmatprep.subr.bf16.mxu0 0
    %579 = vmatpush1.bf16.msra.mxu0 0
    %580 = vmatprep.subr.bf16.mxu0 0
    %581 = vmatpush1.bf16.msra.mxu0 0
    %582 = vmatprep.subr.bf16.mxu0 0
    %583 = vmatpush1.bf16.msra.mxu0 0
    %584 = vmatprep.subr.bf16.mxu0 0
    %585 = vmatpush1.bf16.msra.mxu0 0
    %586 = vmatprep.subr.bf16.mxu0 0
    %587 = vmatpush1.bf16.msra.mxu0 0
    %588 = vmatprep.subr.bf16.mxu0 0
    %589 = vmatpush1.bf16.msra.mxu0 0
    %590 = vmatprep.mubr.bf16.mxu0 0
    %591 = vmatmul.mubr.bf16.gmra.mrb[0].mxu0 %v556
    %v592 = vpop.f32.mrb[0].mxu0
    %v593 = vadd.f32 0.0, %v592
    %v594 = vpop.f32.mrb[0].mxu0
    %v595 = vpop.f32.mrb[0].mxu0
    %v596 = vpop.f32.mrb[0].mxu0
    %597 = vdwg.mxu0
    %v599 = vrot.slane %v593, 6
    %v601 = vadd.f32 %v156, %v599
    %v602 = vxor.u32 %v601, 2147483648
    %v603 = vmul.f32 %v602, 1.442695
    %v604 = vpow.pop %v603
    %v605 = vadd.f32 %v604, 1.0
    %v606 = vrcp.pop %v605
    %v607 = vmul.f32 1.0, %v606
    %v608 = vtanh.pop %v601
    %v610 = vrot.slane %v544, 6
    %v612 = vmul.f32 %v607, %v610
    %614 = vrot.lane.b32.xlu0 %v608, 64
    %v615 = vpop.permute.xlu0 %614
    %v617 = vmul.f32 %v607, %v615
    %619 = vrot.lane.b32.xlu0 %v617, 32
    %v620 = vpop.permute.xlu0 %619
    %v622 = vadd.f32 %v612, %v620
    %v623 = vtanh.pop %v622
    %625 = vrot.lane.b32.xlu0 %v623, 64
    %v626 = vpop.permute.xlu0 %625
    %v628 = vmul.f32 %v607, %v626
    %v629 = vpack.c.bf16 %v628, %v628
    %v631 = vrot.slane %v629, 1
    %632 = vrot.lane.b32.xlu0 %v631, 32
    %v633 = vpop.permute.xlu0 %632
    %v635 = vsel %vm114, %v633, 0
    %637 = vmatprep.subr.bf16.mxu0 0
    %638 = vmatpush1.bf16.msra.mxu0 %v167
    %639 = vmatprep.subr.bf16.mxu0 0
    %640 = vmatpush1.bf16.msra.mxu0 %v168
    %641 = vmatprep.subr.bf16.mxu0 0
    %642 = vmatpush1.bf16.msra.mxu0 0
    %643 = vmatprep.subr.bf16.mxu0 0
    %644 = vmatpush1.bf16.msra.mxu0 0
    %645 = vmatprep.subr.bf16.mxu0 0
    %646 = vmatpush1.bf16.msra.mxu0 0
    %647 = vmatprep.subr.bf16.mxu0 0
    %648 = vmatpush1.bf16.msra.mxu0 0
    %649 = vmatprep.subr.bf16.mxu0 0
    %650 = vmatpush1.bf16.msra.mxu0 0
    %651 = vmatprep.subr.bf16.mxu0 0
    %652 = vmatpush1.bf16.msra.mxu0 0
    %653 = vmatprep.subr.bf16.mxu0 0
    %654 = vmatpush1.bf16.msra.mxu0 0
    %655 = vmatprep.subr.bf16.mxu0 0
    %656 = vmatpush1.bf16.msra.mxu0 0
    %657 = vmatprep.subr.bf16.mxu0 0
    %658 = vmatpush1.bf16.msra.mxu0 0
    %659 = vmatprep.subr.bf16.mxu0 0
    %660 = vmatpush1.bf16.msra.mxu0 0
    %661 = vmatprep.subr.bf16.mxu0 0
    %662 = vmatpush1.bf16.msra.mxu0 0
    %663 = vmatprep.subr.bf16.mxu0 0
    %664 = vmatpush1.bf16.msra.mxu0 0
    %665 = vmatprep.subr.bf16.mxu0 0
    %666 = vmatpush1.bf16.msra.mxu0 0
    %667 = vmatprep.subr.bf16.mxu0 0
    %668 = vmatpush1.bf16.msra.mxu0 0
    %669 = vmatprep.mubr.bf16.mxu0 0
    %670 = vmatmul.mubr.bf16.gmra.mrb[0].mxu0 %v635
    %v671 = vpop.f32.mrb[0].mxu0
    %v672 = vadd.f32 0.0, %v671
    %v673 = vpop.f32.mrb[0].mxu0
    %v674 = vpop.f32.mrb[0].mxu0
    %v675 = vpop.f32.mrb[0].mxu0
    %676 = vdwg.mxu0
    %v678 = vrot.slane %v672, 4
    %v680 = vadd.f32 %v156, %v678
    %v681 = vxor.u32 %v680, 2147483648
    %v682 = vmul.f32 %v681, 1.442695
    %v683 = vpow.pop %v682
    %v684 = vadd.f32 %v683, 1.0
    %v685 = vrcp.pop %v684
    %v686 = vmul.f32 1.0, %v685
    %v687 = vtanh.pop %v680
    %v689 = vrot.slane %v622, 6
    %v691 = vmul.f32 %v686, %v689
    %693 = vrot.lane.b32.xlu0 %v687, 64
    %v694 = vpop.permute.xlu0 %693
    %v696 = vmul.f32 %v686, %v694
    %698 = vrot.lane.b32.xlu0 %v696, 32
    %v699 = vpop.permute.xlu0 %698
    %v701 = vadd.f32 %v691, %v699
    %v702 = vtanh.pop %v701
    %704 = vrot.lane.b32.xlu0 %v702, 64
    %v705 = vpop.permute.xlu0 %704
    %v707 = vmul.f32 %v686, %v705
    %v708 = vpack.c.bf16 %v707, %v707
    %v710 = vrot.slane %v708, 2
    %711 = vrot.lane.b32.xlu0 %v710, 32
    %v712 = vpop.permute.xlu0 %711
    %v714 = vsel %vm114, %v712, 0
    %716 = vmatprep.subr.bf16.mxu0 0
    %717 = vmatpush1.bf16.msra.mxu0 %v167
    %718 = vmatprep.subr.bf16.mxu0 0
    %719 = vmatpush1.bf16.msra.mxu0 %v168
    %720 = vmatprep.subr.bf16.mxu0 0
    %721 = vmatpush1.bf16.msra.mxu0 0
    %722 = vmatprep.subr.bf16.mxu0 0
    %723 = vmatpush1.bf16.msra.mxu0 0
    %724 = vmatprep.subr.bf16.mxu0 0
    %725 = vmatpush1.bf16.msra.mxu0 0
    %726 = vmatprep.subr.bf16.mxu0 0
    %727 = vmatpush1.bf16.msra.mxu0 0
    %728 = vmatprep.subr.bf16.mxu0 0
    %729 = vmatpush1.bf16.msra.mxu0 0
    %730 = vmatprep.subr.bf16.mxu0 0
    %731 = vmatpush1.bf16.msra.mxu0 0
    %732 = vmatprep.subr.bf16.mxu0 0
    %733 = vmatpush1.bf16.msra.mxu0 0
    %734 = vmatprep.subr.bf16.mxu0 0
    %735 = vmatpush1.bf16.msra.mxu0 0
    %736 = vmatprep.subr.bf16.mxu0 0
    %737 = vmatpush1.bf16.msra.mxu0 0
    %738 = vmatprep.subr.bf16.mxu0 0
    %739 = vmatpush1.bf16.msra.mxu0 0
    %740 = vmatprep.subr.bf16.mxu0 0
    %741 = vmatpush1.bf16.msra.mxu0 0
    %742 = vmatprep.subr.bf16.mxu0 0
    %743 = vmatpush1.bf16.msra.mxu0 0
    %744 = vmatprep.subr.bf16.mxu0 0
    %745 = vmatpush1.bf16.msra.mxu0 0
    %746 = vmatprep.subr.bf16.mxu0 0
    %747 = vmatpush1.bf16.msra.mxu0 0
    %748 = vmatprep.mubr.bf16.mxu0 0
    %749 = vmatmul.mubr.bf16.gmra.mrb[0].mxu0 %v714
    %v750 = vpop.f32.mrb[0].mxu0
    %v751 = vadd.f32 0.0, %v750
    %v752 = vpop.f32.mrb[0].mxu0
    %v753 = vpop.f32.mrb[0].mxu0
    %v754 = vpop.f32.mrb[0].mxu0
    %755 = vdwg.mxu0
    %v757 = vrot.slane %v751, 2
    %v759 = vadd.f32 %v156, %v757
    %v760 = vxor.u32 %v759, 2147483648
    %v761 = vmul.f32 %v760, 1.442695
    %v762 = vpow.pop %v761
    %v763 = vadd.f32 %v762, 1.0
    %v764 = vrcp.pop %v763
    %v765 = vmul.f32 1.0, %v764
    %v766 = vtanh.pop %v759
    %v768 = vrot.slane %v701, 6
    %v770 = vmul.f32 %v765, %v768
    %772 = vrot.lane.b32.xlu0 %v766, 64
    %v773 = vpop.permute.xlu0 %772
    %v775 = vmul.f32 %v765, %v773
    %777 = vrot.lane.b32.xlu0 %v775, 32
    %v778 = vpop.permute.xlu0 %777
    %v780 = vadd.f32 %v770, %v778
    %v781 = vtanh.pop %v780
    %783 = vrot.lane.b32.xlu0 %v781, 64
    %v784 = vpop.permute.xlu0 %783
    %v786 = vmul.f32 %v765, %v784
    %v787 = vpack.c.bf16 %v786, %v786
    %v788 = vld [vmem:[#allocation8] sm:$0xf]
    %v789 = vld [vmem:[#allocation8 + $0x4] sm:$0xf]
    %v790 = vld [vmem:[#allocation8 + $0x8] sm:$0xf]
    %v791 = vld [vmem:[#allocation8 + $0xc] sm:$0xf]
    %v792 = vld [vmem:[%s5] sm:$0x1]
    %v794 = vlaneseq
    %v795 = vshrl.u32 %v794, 7
    %v796 = vsub.s32 0, %v795
    %v797 = vrot.slane %v792, %v796
    %v800 = vrot.slane %v787, 3
    %801 = vrot.lane.b32.xlu0 %v800, 32
    %v802 = vpop.permute.xlu0 %801
    %v807 = vunpack.c.l.b16 %v788
    %v808 = vunpack.c.l.b16 %v789
    %v809 = vunpack.c.l.b16 %v790
    %v810 = vunpack.c.l.b16 %v791
    %v811 = vpack.c.b16 %v808, %v807
    %v812 = vpack.c.b16 %v810, %v809
    %v816 = vsel %vm114, %v802, 0
    %818 = vmatprep.subr.bf16.mxu0 0
    %819 = vmatpush1.bf16.msra.mxu0 %v811
    %820 = vmatprep.subr.bf16.mxu0 0
    %821 = vmatpush1.bf16.msra.mxu0 %v812
    %822 = vmatprep.subr.bf16.mxu0 0
    %823 = vmatpush1.bf16.msra.mxu0 0
    %824 = vmatprep.subr.bf16.mxu0 0
    %825 = vmatpush1.bf16.msra.mxu0 0
    %826 = vmatprep.subr.bf16.mxu0 0
    %827 = vmatpush1.bf16.msra.mxu0 0
    %828 = vmatprep.subr.bf16.mxu0 0
    %829 = vmatpush1.bf16.msra.mxu0 0
    %830 = vmatprep.subr.bf16.mxu0 0
    %831 = vmatpush1.bf16.msra.mxu0 0
    %832 = vmatprep.subr.bf16.mxu0 0
    %833 = vmatpush1.bf16.msra.mxu0 0
    %834 = vmatprep.subr.bf16.mxu0 0
    %835 = vmatpush1.bf16.msra.mxu0 0
    %836 = vmatprep.subr.bf16.mxu0 0
    %837 = vmatpush1.bf16.msra.mxu0 0
    %838 = vmatprep.subr.bf16.mxu0 0
    %839 = vmatpush1.bf16.msra.mxu0 0
    %840 = vmatprep.subr.bf16.mxu0 0
    %841 = vmatpush1.bf16.msra.mxu0 0
    %842 = vmatprep.subr.bf16.mxu0 0
    %843 = vmatpush1.bf16.msra.mxu0 0
    %844 = vmatprep.subr.bf16.mxu0 0
    %845 = vmatpush1.bf16.msra.mxu0 0
    %846 = vmatprep.subr.bf16.mxu0 0
    %847 = vmatpush1.bf16.msra.mxu0 0
    %848 = vmatprep.subr.bf16.mxu0 0
    %849 = vmatpush1.bf16.msra.mxu0 0
    %850 = vmatprep.mubr.bf16.mxu0 0
    %851 = vmatmul.mubr.bf16.gmra.mrb[0].mxu0 %v816
    %v852 = vpop.f32.mrb[0].mxu0
    %v853 = vadd.f32 %v797, %v852
    %v854 = vpop.f32.mrb[0].mxu0
    %v855 = vpop.f32.mrb[0].mxu0
    %v856 = vpop.f32.mrb[0].mxu0
    %857 = vdwg.mxu0
    %858 = vst [vmem:[#allocation10] sm:$0x3] %v853
    // Predicated region
    $region42: #{tpu_custom_call.1} parent=1 // pred_check
      _
    $region43: #{tpu_custom_call.1} parent=1 // pred_check_branch
      %860 = sbr.rel (0) target = $region45
    $region44: #{tpu_custom_call.1} parent=1 // pred_region
      %s862 = ssub.s32 32, 32
      %863 = vsyncadd [#allocation4], %s862
      %s865 = sshll.u32 [#allocation10], 4
      %s866 = int_to_ptr.vmem [resolvable:$true] %s865
      %868 = dma.vmem_to_hbm [thread:$0]  %s866, 32, %s6, [#allocation4]
    $region45: #{tpu_custom_call.1} parent=1 // pred_fallthru
      _
    // Predicated region
    $region46: #{tpu_custom_call.1} parent=1 // pred_check
      _
    $region47: #{tpu_custom_call.1} parent=1 // pred_check_branch
      %870 = sbr.rel (0) target = $region49
    $region48: #{tpu_custom_call.1} parent=1 // pred_region
      %871 = dma.done [#allocation4], 32
    $region49: #{tpu_custom_call.1} parent=1 // pred_fallthru
      _
    %872 = vsyncpa [#allocation3], 1
    %873 = vsyncpa [#allocation6], 1
    %874 = vsyncpa [#allocation9], 1
    %875 = vsyncpa [#allocation4], 1

</llo_original>
